<compile_context>
chip_gen: v7x
topology: tpu7x:2x2x1
jax: 0.10.0
libtpu: 0.0.40
codegen_flags: <defaults>
</compile_context>

<pallas_src>
import functools

import jax
import jax.numpy as jnp
from jax import lax
from jax.experimental import pallas as pl
from jax.experimental.pallas import tpu as pltpu

# power_nb == 3 flux coefficients from f_real()
_COE3 = (-0.1428, 1.8134, 1.1932, -1.9714, 0.0316, -0.8895, 1.9653, -1.1219)

_LANES = 128    # TPU lane width; spatial axis is padded to a multiple of this.
_SUBLANES = 8   # f32 sublane width; batch axis is padded to a multiple of this.


def _advance(u, masks, *, r, flux_c, dflux_c, width):
    """One Rusanov step on the padded (B_pad, width) state. Padded lanes frozen."""
    d0, d1, d2, d3 = flux_c
    e1, e2, e3 = dflux_c
    is_left, is_right, is_pad = masks

    # Horner-form flux and |flux'| with beta already folded into d*/e*.
    f = d0 + u * (d1 + u * (d2 + u * d3))
    fp = jnp.abs(e1 + u * (e2 + u * e3))

    # Bring element j+1 to lane j, then RECOMPUTE the shifted flux/derivative
    # on the VPU (4-wide VALU has slack) instead of two more XLU rolls.
    # TODO(synk): for W > 128, check whether Mosaic canonicalizes a (W-1)-lane
    # rotate to a 1-lane rotate in the opposite direction; at W == 128 it is moot.
    shift_left = width - 1
    u_r = pltpu.roll(u, shift_left, 1)                      # u[:, j+1]
    f_r = d0 + u_r * (d1 + u_r * (d2 + u_r * d3))           # f[:, j+1]
    fp_r = jnp.abs(e1 + u_r * (e2 + u_r * e3))              # fp[:, j+1]

    # f_half[:, j] = 0.5*(f[j]+f[j+1]) - 0.5*max(fp[j],fp[j+1])*(u[j+1]-u[j])
    f_half = 0.5 * (f + f_r) - 0.5 * jnp.maximum(fp, fp_r) * (u_r - u)
    f_half_l = pltpu.roll(f_half, 1, 1)                     # f_half[:, j-1]

    # Interior update (valid for 1 <= j <= n_real-2; other lanes fixed below).
    u_int = u - r * (f_half - f_half_l)

    u_from_right = pltpu.roll(u_int, shift_left, 1)         # u_int[:, j+1]
    u_from_left = pltpu.roll(u_int, 1, 1)                   # u_int[:, j-1]

    # lane 0        -> u_int[:, 1]          (ghost cell copy)
    # lane n_real-1 -> u_int[:, n_real-2]   (ghost cell copy)
    # lanes >= n_real (padding) -> frozen at old value (never read by real lanes)
    u_new = jnp.where(is_left, u_from_right, u_int)
    u_new = jnp.where(is_right, u_from_left, u_new)
    u_new = jnp.where(is_pad, u, u_new)
    return u_new


def _rollout_kernel(init_ref, traj_ref, u_scr, *, r, flux_c, dflux_c, n_real,
                    width, steps_per_block, unroll):
    g = pl.program_id(0)

    @pl.when(g == 0)
    def _():
        u_scr[...] = init_ref[...]

    # Boundary / padding masks hoisted out of the (unrolled) step loop.
    lane = lax.broadcasted_iota(jnp.int32, u_scr.shape, 1)
    masks = (lane == 0, lane == n_real - 1, lane >= n_real)

    def step_body(t, u):
        # Store-then-advance: trajectory slot t gets the *current* state; the
        # trailing advance of the final stored step is never observed.
        traj_ref[t] = u                    # lane-dense, unmasked store
        return _advance(u, masks, r=r, flux_c=flux_c, dflux_c=dflux_c,
                        width=width)

    u_final = lax.fori_loop(0, steps_per_block, step_body, u_scr[...],
                            unroll=unroll)
    u_scr[...] = u_final


def variant_coe_linear1d_forward(init, stepnum, *, dt, dx, beta,
                                 steps_per_block=8):
    """init: (batch, N) float32. Returns trajectories (stepnum, batch, N) float32."""
    B, N = init.shape
    assert N >= 3, "spatial grid must have at least 3 cells"
    assert stepnum >= 1

    # Fold beta into the cubic coefficients (trace-time python math).
    c0, c1, c2, c3, c4, c5, c6, c7 = _COE3
    d0 = c0 + beta * c4
    d1 = c1 + beta * c5
    d2 = c2 + beta * c6
    d3 = c3 + beta * c7
    flux_c = (d0, d1, d2, d3)
    dflux_c = (d1, 2.0 * d2, 3.0 * d3)

    # Pad spatial axis to a multiple of 128 lanes and batch to a multiple of 8
    # sublanes so every vreg is full and every store is unmasked.
    W = ((N + _LANES - 1) // _LANES) * _LANES
    B_pad = ((B + _SUBLANES - 1) // _SUBLANES) * _SUBLANES
    init_p = jnp.pad(init.astype(jnp.float32), ((0, B_pad - B), (0, W - N)))

    # Batch T time steps per grid iteration (amortizes ~0.35 us/grid-step and
    # emits one (T, B_pad, W) writeback DMA per block). Full unroll only for
    # small T; partial unroll keeps LLO visibility without instruction bloat.
    T = max(1, min(int(steps_per_block), int(stepnum)))
    num_blocks = pl.cdiv(stepnum, T)
    stepnum_pad = num_blocks * T
    unroll = True if T <= 8 else 8

    kernel = functools.partial(
        _rollout_kernel,
        r=float(dt) / float(dx),
        flux_c=flux_c,
        dflux_c=dflux_c,
        n_real=N,
        width=W,
        steps_per_block=T,
        unroll=unroll,
    )

    traj_p = pl.pallas_call(
        kernel,
        out_shape=jax.ShapeDtypeStruct((stepnum_pad, B_pad, W), jnp.float32),
        grid=(num_blocks,),
        in_specs=[pl.BlockSpec((B_pad, W), lambda g: (0, 0))],
        out_specs=pl.BlockSpec((T, B_pad, W), lambda g: (g, 0, 0)),
        scratch_shapes=[pltpu.VMEM((B_pad, W), jnp.float32)],
        compiler_params=pltpu.CompilerParams(
            dimension_semantics=("arbitrary",),  # time steps are sequential
        ),
    )(init_p)

    if stepnum_pad == stepnum and B_pad == B and W == N:
        return traj_p                      # no depad copy needed
    return traj_p[:stepnum, :B, :N]


def _reference_forward(init, stepnum, *, dt, dx, beta):
    """Pure-JAX replica of the PyTorch forward (is_train=False, power_nb=3)."""
    c0, c1, c2, c3, c4, c5, c6, c7 = _COE3

    def flux(u):
        u2 = u * u
        u3 = u2 * u
        return (c0 + c1 * u + c2 * u2 + c3 * u3) + beta * (c4 + c5 * u + c6 * u2 + c7 * u3)

    def dflux(u):
        u2 = u * u
        return (c1 + 2.0 * c2 * u + 3.0 * c3 * u2) + beta * (c5 + 2.0 * c6 * u + 3.0 * c7 * u2)

    r = dt / dx
    u = init
    traj = [u]
    for _ in range(1, stepnum):
        f = flux(u)
        fp = jnp.abs(dflux(u))
        alpha = jnp.maximum(fp[:, :-1], fp[:, 1:])
        f_half = 0.5 * (f[:, :-1] + f[:, 1:]) - 0.5 * alpha * (u[:, 1:] - u[:, :-1])
        interior = u[:, 1:-1] - r * (f_half[:, 1:] - f_half[:, :-1])
        u = jnp.concatenate([interior[:, :1], interior, interior[:, -1:]], axis=1)
        traj.append(u)
    return jnp.stack(traj, axis=0)


if __name__ == "__main__":
    # Deterministic small problem consistent with the module's forward().
    batch_size = 4
    N = 16
    stepnum = 8
    dt = 0.01
    dx = 0.1
    beta = 0.5

    key = jax.random.PRNGKey(0)
    init = jax.random.uniform(key, (batch_size, N), dtype=jnp.float32)

    traj = variant_coe_linear1d_forward(init, stepnum, dt=dt, dx=dx, beta=beta)
    traj = jax.block_until_ready(traj)

    ref = _reference_forward(init, stepnum, dt=dt, dx=dx, beta=beta)
    assert traj.shape == (stepnum, batch_size, N)
    assert jnp.allclose(traj, ref, rtol=1e-4, atol=1e-5), "mismatch vs pure-JAX reference"

    print("KERNEL_OK")
</pallas_src>

<mosaic_0001>
module attributes {stable_mosaic.version = 11 : i64} {
  func.func @_rollout_kernel(%arg0: i32, %arg1: memref<8x128xf32, #tpu.memory_space<vmem>>, %arg2: memref<8x8x128xf32, #tpu.memory_space<vmem>>, %arg3: memref<8x128xf32, #tpu.memory_space<vmem>>) attributes {dimension_semantics = [#tpu.dimension_semantics<arbitrary>], iteration_bounds = array<i64: 1>, scalar_prefetch = 0 : i64, scratch_operands = 1 : i64, tpu.core_type = #tpu.core_type<tc>, window_params = [{pipeline_mode = #tpu.pipeline_mode<synchronous>, transform_indices = @transform_0, window_bounds = array<i64: 8, 128>}, {transform_indices = @transform_1, window_bounds = array<i64: 8, 8, 128>}]} {
    %c0_i32 = arith.constant 0 : i32
    %0 = arith.cmpi eq, %arg0, %c0_i32 : i32
    %1 = arith.extui %0 : i1 to i32
    %c0_i32_0 = arith.constant 0 : i32
    %2 = arith.cmpi ne, %1, %c0_i32_0 : i32
    scf.if %2 {
      %c0_188 = arith.constant 0 : index
      %c0_189 = arith.constant 0 : index
      %492 = vector.load %arg1[%c0_188, %c0_189] : memref<8x128xf32, #tpu.memory_space<vmem>>, vector<8x128xf32>
      %c0_190 = arith.constant 0 : index
      %c0_191 = arith.constant 0 : index
      %493 = vector.load %arg3[%c0_190, %c0_191] : memref<8x128xf32, #tpu.memory_space<vmem>>, vector<8x128xf32>
      tpu.vector_store %arg3[%c0_190, %c0_191], %492 {strides = array<i32>} : memref<8x128xf32, #tpu.memory_space<vmem>>, vector<8x128xf32>,
    } else {
    }
    %3 = tpu.iota {dimensions = array<i32: 1>} : vector<8x128xi32>
    %c0_i32_1 = arith.constant 0 : i32
    %4 = vector.broadcast %c0_i32_1 : i32 to vector<8x128xi32>
    %5 = arith.cmpi eq, %3, %4 : vector<8x128xi32>
    %c15_i32 = arith.constant 15 : i32
    %6 = vector.broadcast %c15_i32 : i32 to vector<8x128xi32>
    %7 = arith.cmpi eq, %3, %6 : vector<8x128xi32>
    %c16_i32 = arith.constant 16 : i32
    %8 = vector.broadcast %c16_i32 : i32 to vector<8x128xi32>
    %9 = arith.cmpi sge, %3, %8 : vector<8x128xi32>
    %c0 = arith.constant 0 : index
    %c0_2 = arith.constant 0 : index
    %10 = vector.load %arg3[%c0, %c0_2] : memref<8x128xf32, #tpu.memory_space<vmem>>, vector<8x128xf32>
    %c0_i32_3 = arith.constant 0 : i32
    %11 = arith.index_cast %c0_i32_3 : i32 to index
    %c0_4 = arith.constant 0 : index
    %c0_5 = arith.constant 0 : index
    %12 = vector.load %arg2[%11, %c0_4, %c0_5] : memref<8x8x128xf32, #tpu.memory_space<vmem>>, vector<1x8x128xf32>
    %13 = vector.shape_cast %12 : vector<1x8x128xf32> to vector<8x128xf32>
    %14 = vector.shape_cast %10 : vector<8x128xf32> to vector<1x8x128xf32>
    tpu.vector_store %arg2[%11, %c0_4, %c0_5], %14 {strides = array<i32>} : memref<8x8x128xf32, #tpu.memory_space<vmem>>, vector<1x8x128xf32>,
    %cst = arith.constant -2.532350e+00 : f32
    %15 = vector.broadcast %cst : f32 to vector<8x128xf32>
    %16 = arith.mulf %10, %15 : vector<8x128xf32>
    %cst_6 = arith.constant 2.175850e+00 : f32
    %17 = vector.broadcast %cst_6 : f32 to vector<8x128xf32>
    %18 = arith.addf %17, %16 : vector<8x128xf32>
    %19 = arith.mulf %10, %18 : vector<8x128xf32>
    %cst_7 = arith.constant 1.368650e+00 : f32
    %20 = vector.broadcast %cst_7 : f32 to vector<8x128xf32>
    %21 = arith.addf %20, %19 : vector<8x128xf32>
    %22 = arith.mulf %10, %21 : vector<8x128xf32>
    %cst_8 = arith.constant -1.270000e-01 : f32
    %23 = vector.broadcast %cst_8 : f32 to vector<8x128xf32>
    %24 = arith.addf %23, %22 : vector<8x128xf32>
    %cst_9 = arith.constant -7.597050e+00 : f32
    %25 = vector.broadcast %cst_9 : f32 to vector<8x128xf32>
    %26 = arith.mulf %10, %25 : vector<8x128xf32>
    %cst_10 = arith.constant 4.351700e+00 : f32
    %27 = vector.broadcast %cst_10 : f32 to vector<8x128xf32>
    %28 = arith.addf %27, %26 : vector<8x128xf32>
    %29 = arith.mulf %10, %28 : vector<8x128xf32>
    %cst_11 = arith.constant 1.368650e+00 : f32
    %30 = vector.broadcast %cst_11 : f32 to vector<8x128xf32>
    %31 = arith.addf %30, %29 : vector<8x128xf32>
    %32 = math.absf %31 : vector<8x128xf32>
    %c127_i32 = arith.constant 127 : i32
    %33 = tpu.dynamic_rotate %10 by %c127_i32 dim 1 : vector<8x128xf32>, i32 -> vector<8x128xf32>
    %cst_12 = arith.constant -2.532350e+00 : f32
    %34 = vector.broadcast %cst_12 : f32 to vector<8x128xf32>
    %35 = arith.mulf %33, %34 : vector<8x128xf32>
    %cst_13 = arith.constant 2.175850e+00 : f32
    %36 = vector.broadcast %cst_13 : f32 to vector<8x128xf32>
    %37 = arith.addf %36, %35 : vector<8x128xf32>
    %38 = arith.mulf %33, %37 : vector<8x128xf32>
    %cst_14 = arith.constant 1.368650e+00 : f32
    %39 = vector.broadcast %cst_14 : f32 to vector<8x128xf32>
    %40 = arith.addf %39, %38 : vector<8x128xf32>
    %41 = arith.mulf %33, %40 : vector<8x128xf32>
    %cst_15 = arith.constant -1.270000e-01 : f32
    %42 = vector.broadcast %cst_15 : f32 to vector<8x128xf32>
    %43 = arith.addf %42, %41 : vector<8x128xf32>
    %cst_16 = arith.constant -7.597050e+00 : f32
    %44 = vector.broadcast %cst_16 : f32 to vector<8x128xf32>
    %45 = arith.mulf %33, %44 : vector<8x128xf32>
    %cst_17 = arith.constant 4.351700e+00 : f32
    %46 = vector.broadcast %cst_17 : f32 to vector<8x128xf32>
    %47 = arith.addf %46, %45 : vector<8x128xf32>
    %48 = arith.mulf %33, %47 : vector<8x128xf32>
    %cst_18 = arith.constant 1.368650e+00 : f32
    %49 = vector.broadcast %cst_18 : f32 to vector<8x128xf32>
    %50 = arith.addf %49, %48 : vector<8x128xf32>
    %51 = math.absf %50 : vector<8x128xf32>
    %52 = arith.addf %24, %43 : vector<8x128xf32>
    %cst_19 = arith.constant 5.000000e-01 : f32
    %53 = vector.broadcast %cst_19 : f32 to vector<8x128xf32>
    %54 = arith.mulf %53, %52 : vector<8x128xf32>
    %55 = arith.maximumf %32, %51 : vector<8x128xf32>
    %cst_20 = arith.constant 5.000000e-01 : f32
    %56 = vector.broadcast %cst_20 : f32 to vector<8x128xf32>
    %57 = arith.mulf %56, %55 : vector<8x128xf32>
    %58 = arith.subf %33, %10 : vector<8x128xf32>
    %59 = arith.mulf %57, %58 : vector<8x128xf32>
    %60 = arith.subf %54, %59 : vector<8x128xf32>
    %c1_i32 = arith.constant 1 : i32
    %61 = tpu.dynamic_rotate %60 by %c1_i32 dim 1 : vector<8x128xf32>, i32 -> vector<8x128xf32>
    %62 = arith.subf %60, %61 : vector<8x128xf32>
    %cst_21 = arith.constant 1.000000e-01 : f32
    %63 = vector.broadcast %cst_21 : f32 to vector<8x128xf32>
    %64 = arith.mulf %63, %62 : vector<8x128xf32>
    %65 = arith.subf %10, %64 : vector<8x128xf32>
    %c127_i32_22 = arith.constant 127 : i32
    %66 = tpu.dynamic_rotate %65 by %c127_i32_22 dim 1 : vector<8x128xf32>, i32 -> vector<8x128xf32>
    %c1_i32_23 = arith.constant 1 : i32
    %67 = tpu.dynamic_rotate %65 by %c1_i32_23 dim 1 : vector<8x128xf32>, i32 -> vector<8x128xf32>
    %68 = arith.select %5, %66, %65 : vector<8x128xi1>, vector<8x128xf32>
    %69 = arith.select %7, %67, %68 : vector<8x128xi1>, vector<8x128xf32>
    %70 = arith.select %9, %10, %69 : vector<8x128xi1>, vector<8x128xf32>
    %c1_i32_24 = arith.constant 1 : i32
    %71 = arith.index_cast %c1_i32_24 : i32 to index
    %c0_25 = arith.constant 0 : index
    %c0_26 = arith.constant 0 : index
    %72 = vector.load %arg2[%71, %c0_25, %c0_26] : memref<8x8x128xf32, #tpu.memory_space<vmem>>, vector<1x8x128xf32>
    %73 = vector.shape_cast %72 : vector<1x8x128xf32> to vector<8x128xf32>
    %74 = vector.shape_cast %70 : vector<8x128xf32> to vector<1x8x128xf32>
    tpu.vector_store %arg2[%71, %c0_25, %c0_26], %74 {strides = array<i32>} : memref<8x8x128xf32, #tpu.memory_space<vmem>>, vector<1x8x128xf32>,
    %cst_27 = arith.constant -2.532350e+00 : f32
    %75 = vector.broadcast %cst_27 : f32 to vector<8x128xf32>
    %76 = arith.mulf %70, %75 : vector<8x128xf32>
    %cst_28 = arith.constant 2.175850e+00 : f32
    %77 = vector.broadcast %cst_28 : f32 to vector<8x128xf32>
    %78 = arith.addf %77, %76 : vector<8x128xf32>
    %79 = arith.mulf %70, %78 : vector<8x128xf32>
    %cst_29 = arith.constant 1.368650e+00 : f32
    %80 = vector.broadcast %cst_29 : f32 to vector<8x128xf32>
    %81 = arith.addf %80, %79 : vector<8x128xf32>
    %82 = arith.mulf %70, %81 : vector<8x128xf32>
    %cst_30 = arith.constant -1.270000e-01 : f32
    %83 = vector.broadcast %cst_30 : f32 to vector<8x128xf32>
    %84 = arith.addf %83, %82 : vector<8x128xf32>
    %cst_31 = arith.constant -7.597050e+00 : f32
    %85 = vector.broadcast %cst_31 : f32 to vector<8x128xf32>
    %86 = arith.mulf %70, %85 : vector<8x128xf32>
    %cst_32 = arith.constant 4.351700e+00 : f32
    %87 = vector.broadcast %cst_32 : f32 to vector<8x128xf32>
    %88 = arith.addf %87, %86 : vector<8x128xf32>
    %89 = arith.mulf %70, %88 : vector<8x128xf32>
    %cst_33 = arith.constant 1.368650e+00 : f32
    %90 = vector.broadcast %cst_33 : f32 to vector<8x128xf32>
    %91 = arith.addf %90, %89 : vector<8x128xf32>
    %92 = math.absf %91 : vector<8x128xf32>
    %c127_i32_34 = arith.constant 127 : i32
    %93 = tpu.dynamic_rotate %70 by %c127_i32_34 dim 1 : vector<8x128xf32>, i32 -> vector<8x128xf32>
    %cst_35 = arith.constant -2.532350e+00 : f32
    %94 = vector.broadcast %cst_35 : f32 to vector<8x128xf32>
    %95 = arith.mulf %93, %94 : vector<8x128xf32>
    %cst_36 = arith.constant 2.175850e+00 : f32
    %96 = vector.broadcast %cst_36 : f32 to vector<8x128xf32>
    %97 = arith.addf %96, %95 : vector<8x128xf32>
    %98 = arith.mulf %93, %97 : vector<8x128xf32>
    %cst_37 = arith.constant 1.368650e+00 : f32
    %99 = vector.broadcast %cst_37 : f32 to vector<8x128xf32>
    %100 = arith.addf %99, %98 : vector<8x128xf32>
    %101 = arith.mulf %93, %100 : vector<8x128xf32>
    %cst_38 = arith.constant -1.270000e-01 : f32
    %102 = vector.broadcast %cst_38 : f32 to vector<8x128xf32>
    %103 = arith.addf %102, %101 : vector<8x128xf32>
    %cst_39 = arith.constant -7.597050e+00 : f32
    %104 = vector.broadcast %cst_39 : f32 to vector<8x128xf32>
    %105 = arith.mulf %93, %104 : vector<8x128xf32>
    %cst_40 = arith.constant 4.351700e+00 : f32
    %106 = vector.broadcast %cst_40 : f32 to vector<8x128xf32>
    %107 = arith.addf %106, %105 : vector<8x128xf32>
    %108 = arith.mulf %93, %107 : vector<8x128xf32>
    %cst_41 = arith.constant 1.368650e+00 : f32
    %109 = vector.broadcast %cst_41 : f32 to vector<8x128xf32>
    %110 = arith.addf %109, %108 : vector<8x128xf32>
    %111 = math.absf %110 : vector<8x128xf32>
    %112 = arith.addf %84, %103 : vector<8x128xf32>
    %cst_42 = arith.constant 5.000000e-01 : f32
    %113 = vector.broadcast %cst_42 : f32 to vector<8x128xf32>
    %114 = arith.mulf %113, %112 : vector<8x128xf32>
    %115 = arith.maximumf %92, %111 : vector<8x128xf32>
    %cst_43 = arith.constant 5.000000e-01 : f32
    %116 = vector.broadcast %cst_43 : f32 to vector<8x128xf32>
    %117 = arith.mulf %116, %115 : vector<8x128xf32>
    %118 = arith.subf %93, %70 : vector<8x128xf32>
    %119 = arith.mulf %117, %118 : vector<8x128xf32>
    %120 = arith.subf %114, %119 : vector<8x128xf32>
    %c1_i32_44 = arith.constant 1 : i32
    %121 = tpu.dynamic_rotate %120 by %c1_i32_44 dim 1 : vector<8x128xf32>, i32 -> vector<8x128xf32>
    %122 = arith.subf %120, %121 : vector<8x128xf32>
    %cst_45 = arith.constant 1.000000e-01 : f32
    %123 = vector.broadcast %cst_45 : f32 to vector<8x128xf32>
    %124 = arith.mulf %123, %122 : vector<8x128xf32>
    %125 = arith.subf %70, %124 : vector<8x128xf32>
    %c127_i32_46 = arith.constant 127 : i32
    %126 = tpu.dynamic_rotate %125 by %c127_i32_46 dim 1 : vector<8x128xf32>, i32 -> vector<8x128xf32>
    %c1_i32_47 = arith.constant 1 : i32
    %127 = tpu.dynamic_rotate %125 by %c1_i32_47 dim 1 : vector<8x128xf32>, i32 -> vector<8x128xf32>
    %128 = arith.select %5, %126, %125 : vector<8x128xi1>, vector<8x128xf32>
    %129 = arith.select %7, %127, %128 : vector<8x128xi1>, vector<8x128xf32>
    %130 = arith.select %9, %70, %129 : vector<8x128xi1>, vector<8x128xf32>
    %c2_i32 = arith.constant 2 : i32
    %131 = arith.index_cast %c2_i32 : i32 to index
    %c0_48 = arith.constant 0 : index
    %c0_49 = arith.constant 0 : index
    %132 = vector.load %arg2[%131, %c0_48, %c0_49] : memref<8x8x128xf32, #tpu.memory_space<vmem>>, vector<1x8x128xf32>
    %133 = vector.shape_cast %132 : vector<1x8x128xf32> to vector<8x128xf32>
    %134 = vector.shape_cast %130 : vector<8x128xf32> to vector<1x8x128xf32>
    tpu.vector_store %arg2[%131, %c0_48, %c0_49], %134 {strides = array<i32>} : memref<8x8x128xf32, #tpu.memory_space<vmem>>, vector<1x8x128xf32>,
    %cst_50 = arith.constant -2.532350e+00 : f32
    %135 = vector.broadcast %cst_50 : f32 to vector<8x128xf32>
    %136 = arith.mulf %130, %135 : vector<8x128xf32>
    %cst_51 = arith.constant 2.175850e+00 : f32
    %137 = vector.broadcast %cst_51 : f32 to vector<8x128xf32>
    %138 = arith.addf %137, %136 : vector<8x128xf32>
    %139 = arith.mulf %130, %138 : vector<8x128xf32>
    %cst_52 = arith.constant 1.368650e+00 : f32
    %140 = vector.broadcast %cst_52 : f32 to vector<8x128xf32>
    %141 = arith.addf %140, %139 : vector<8x128xf32>
    %142 = arith.mulf %130, %141 : vector<8x128xf32>
    %cst_53 = arith.constant -1.270000e-01 : f32
    %143 = vector.broadcast %cst_53 : f32 to vector<8x128xf32>
    %144 = arith.addf %143, %142 : vector<8x128xf32>
    %cst_54 = arith.constant -7.597050e+00 : f32
    %145 = vector.broadcast %cst_54 : f32 to vector<8x128xf32>
    %146 = arith.mulf %130, %145 : vector<8x128xf32>
    %cst_55 = arith.constant 4.351700e+00 : f32
    %147 = vector.broadcast %cst_55 : f32 to vector<8x128xf32>
    %148 = arith.addf %147, %146 : vector<8x128xf32>
    %149 = arith.mulf %130, %148 : vector<8x128xf32>
    %cst_56 = arith.constant 1.368650e+00 : f32
    %150 = vector.broadcast %cst_56 : f32 to vector<8x128xf32>
    %151 = arith.addf %150, %149 : vector<8x128xf32>
    %152 = math.absf %151 : vector<8x128xf32>
    %c127_i32_57 = arith.constant 127 : i32
    %153 = tpu.dynamic_rotate %130 by %c127_i32_57 dim 1 : vector<8x128xf32>, i32 -> vector<8x128xf32>
    %cst_58 = arith.constant -2.532350e+00 : f32
    %154 = vector.broadcast %cst_58 : f32 to vector<8x128xf32>
    %155 = arith.mulf %153, %154 : vector<8x128xf32>
    %cst_59 = arith.constant 2.175850e+00 : f32
    %156 = vector.broadcast %cst_59 : f32 to vector<8x128xf32>
    %157 = arith.addf %156, %155 : vector<8x128xf32>
    %158 = arith.mulf %153, %157 : vector<8x128xf32>
    %cst_60 = arith.constant 1.368650e+00 : f32
    %159 = vector.broadcast %cst_60 : f32 to vector<8x128xf32>
    %160 = arith.addf %159, %158 : vector<8x128xf32>
    %161 = arith.mulf %153, %160 : vector<8x128xf32>
    %cst_61 = arith.constant -1.270000e-01 : f32
    %162 = vector.broadcast %cst_61 : f32 to vector<8x128xf32>
    %163 = arith.addf %162, %161 : vector<8x128xf32>
    %cst_62 = arith.constant -7.597050e+00 : f32
    %164 = vector.broadcast %cst_62 : f32 to vector<8x128xf32>
    %165 = arith.mulf %153, %164 : vector<8x128xf32>
    %cst_63 = arith.constant 4.351700e+00 : f32
    %166 = vector.broadcast %cst_63 : f32 to vector<8x128xf32>
    %167 = arith.addf %166, %165 : vector<8x128xf32>
    %168 = arith.mulf %153, %167 : vector<8x128xf32>
    %cst_64 = arith.constant 1.368650e+00 : f32
    %169 = vector.broadcast %cst_64 : f32 to vector<8x128xf32>
    %170 = arith.addf %169, %168 : vector<8x128xf32>
    %171 = math.absf %170 : vector<8x128xf32>
    %172 = arith.addf %144, %163 : vector<8x128xf32>
    %cst_65 = arith.constant 5.000000e-01 : f32
    %173 = vector.broadcast %cst_65 : f32 to vector<8x128xf32>
    %174 = arith.mulf %173, %172 : vector<8x128xf32>
    %175 = arith.maximumf %152, %171 : vector<8x128xf32>
    %cst_66 = arith.constant 5.000000e-01 : f32
    %176 = vector.broadcast %cst_66 : f32 to vector<8x128xf32>
    %177 = arith.mulf %176, %175 : vector<8x128xf32>
    %178 = arith.subf %153, %130 : vector<8x128xf32>
    %179 = arith.mulf %177, %178 : vector<8x128xf32>
    %180 = arith.subf %174, %179 : vector<8x128xf32>
    %c1_i32_67 = arith.constant 1 : i32
    %181 = tpu.dynamic_rotate %180 by %c1_i32_67 dim 1 : vector<8x128xf32>, i32 -> vector<8x128xf32>
    %182 = arith.subf %180, %181 : vector<8x128xf32>
    %cst_68 = arith.constant 1.000000e-01 : f32
    %183 = vector.broadcast %cst_68 : f32 to vector<8x128xf32>
    %184 = arith.mulf %183, %182 : vector<8x128xf32>
    %185 = arith.subf %130, %184 : vector<8x128xf32>
    %c127_i32_69 = arith.constant 127 : i32
    %186 = tpu.dynamic_rotate %185 by %c127_i32_69 dim 1 : vector<8x128xf32>, i32 -> vector<8x128xf32>
    %c1_i32_70 = arith.constant 1 : i32
    %187 = tpu.dynamic_rotate %185 by %c1_i32_70 dim 1 : vector<8x128xf32>, i32 -> vector<8x128xf32>
    %188 = arith.select %5, %186, %185 : vector<8x128xi1>, vector<8x128xf32>
    %189 = arith.select %7, %187, %188 : vector<8x128xi1>, vector<8x128xf32>
    %190 = arith.select %9, %130, %189 : vector<8x128xi1>, vector<8x128xf32>
    %c3_i32 = arith.constant 3 : i32
    %191 = arith.index_cast %c3_i32 : i32 to index
    %c0_71 = arith.constant 0 : index
    %c0_72 = arith.constant 0 : index
    %192 = vector.load %arg2[%191, %c0_71, %c0_72] : memref<8x8x128xf32, #tpu.memory_space<vmem>>, vector<1x8x128xf32>
    %193 = vector.shape_cast %192 : vector<1x8x128xf32> to vector<8x128xf32>
    %194 = vector.shape_cast %190 : vector<8x128xf32> to vector<1x8x128xf32>
    tpu.vector_store %arg2[%191, %c0_71, %c0_72], %194 {strides = array<i32>} : memref<8x8x128xf32, #tpu.memory_space<vmem>>, vector<1x8x128xf32>,
    %cst_73 = arith.constant -2.532350e+00 : f32
    %195 = vector.broadcast %cst_73 : f32 to vector<8x128xf32>
    %196 = arith.mulf %190, %195 : vector<8x128xf32>
    %cst_74 = arith.constant 2.175850e+00 : f32
    %197 = vector.broadcast %cst_74 : f32 to vector<8x128xf32>
    %198 = arith.addf %197, %196 : vector<8x128xf32>
    %199 = arith.mulf %190, %198 : vector<8x128xf32>
    %cst_75 = arith.constant 1.368650e+00 : f32
    %200 = vector.broadcast %cst_75 : f32 to vector<8x128xf32>
    %201 = arith.addf %200, %199 : vector<8x128xf32>
    %202 = arith.mulf %190, %201 : vector<8x128xf32>
    %cst_76 = arith.constant -1.270000e-01 : f32
    %203 = vector.broadcast %cst_76 : f32 to vector<8x128xf32>
    %204 = arith.addf %203, %202 : vector<8x128xf32>
    %cst_77 = arith.constant -7.597050e+00 : f32
    %205 = vector.broadcast %cst_77 : f32 to vector<8x128xf32>
    %206 = arith.mulf %190, %205 : vector<8x128xf32>
    %cst_78 = arith.constant 4.351700e+00 : f32
    %207 = vector.broadcast %cst_78 : f32 to vector<8x128xf32>
    %208 = arith.addf %207, %206 : vector<8x128xf32>
    %209 = arith.mulf %190, %208 : vector<8x128xf32>
    %cst_79 = arith.constant 1.368650e+00 : f32
    %210 = vector.broadcast %cst_79 : f32 to vector<8x128xf32>
    %211 = arith.addf %210, %209 : vector<8x128xf32>
    %212 = math.absf %211 : vector<8x128xf32>
    %c127_i32_80 = arith.constant 127 : i32
    %213 = tpu.dynamic_rotate %190 by %c127_i32_80 dim 1 : vector<8x128xf32>, i32 -> vector<8x128xf32>
    %cst_81 = arith.constant -2.532350e+00 : f32
    %214 = vector.broadcast %cst_81 : f32 to vector<8x128xf32>
    %215 = arith.mulf %213, %214 : vector<8x128xf32>
    %cst_82 = arith.constant 2.175850e+00 : f32
    %216 = vector.broadcast %cst_82 : f32 to vector<8x128xf32>
    %217 = arith.addf %216, %215 : vector<8x128xf32>
    %218 = arith.mulf %213, %217 : vector<8x128xf32>
    %cst_83 = arith.constant 1.368650e+00 : f32
    %219 = vector.broadcast %cst_83 : f32 to vector<8x128xf32>
    %220 = arith.addf %219, %218 : vector<8x128xf32>
    %221 = arith.mulf %213, %220 : vector<8x128xf32>
    %cst_84 = arith.constant -1.270000e-01 : f32
    %222 = vector.broadcast %cst_84 : f32 to vector<8x128xf32>
    %223 = arith.addf %222, %221 : vector<8x128xf32>
    %cst_85 = arith.constant -7.597050e+00 : f32
    %224 = vector.broadcast %cst_85 : f32 to vector<8x128xf32>
    %225 = arith.mulf %213, %224 : vector<8x128xf32>
    %cst_86 = arith.constant 4.351700e+00 : f32
    %226 = vector.broadcast %cst_86 : f32 to vector<8x128xf32>
    %227 = arith.addf %226, %225 : vector<8x128xf32>
    %228 = arith.mulf %213, %227 : vector<8x128xf32>
    %cst_87 = arith.constant 1.368650e+00 : f32
    %229 = vector.broadcast %cst_87 : f32 to vector<8x128xf32>
    %230 = arith.addf %229, %228 : vector<8x128xf32>
    %231 = math.absf %230 : vector<8x128xf32>
    %232 = arith.addf %204, %223 : vector<8x128xf32>
    %cst_88 = arith.constant 5.000000e-01 : f32
    %233 = vector.broadcast %cst_88 : f32 to vector<8x128xf32>
    %234 = arith.mulf %233, %232 : vector<8x128xf32>
    %235 = arith.maximumf %212, %231 : vector<8x128xf32>
    %cst_89 = arith.constant 5.000000e-01 : f32
    %236 = vector.broadcast %cst_89 : f32 to vector<8x128xf32>
    %237 = arith.mulf %236, %235 : vector<8x128xf32>
    %238 = arith.subf %213, %190 : vector<8x128xf32>
    %239 = arith.mulf %237, %238 : vector<8x128xf32>
    %240 = arith.subf %234, %239 : vector<8x128xf32>
    %c1_i32_90 = arith.constant 1 : i32
    %241 = tpu.dynamic_rotate %240 by %c1_i32_90 dim 1 : vector<8x128xf32>, i32 -> vector<8x128xf32>
    %242 = arith.subf %240, %241 : vector<8x128xf32>
    %cst_91 = arith.constant 1.000000e-01 : f32
    %243 = vector.broadcast %cst_91 : f32 to vector<8x128xf32>
    %244 = arith.mulf %243, %242 : vector<8x128xf32>
    %245 = arith.subf %190, %244 : vector<8x128xf32>
    %c127_i32_92 = arith.constant 127 : i32
    %246 = tpu.dynamic_rotate %245 by %c127_i32_92 dim 1 : vector<8x128xf32>, i32 -> vector<8x128xf32>
    %c1_i32_93 = arith.constant 1 : i32
    %247 = tpu.dynamic_rotate %245 by %c1_i32_93 dim 1 : vector<8x128xf32>, i32 -> vector<8x128xf32>
    %248 = arith.select %5, %246, %245 : vector<8x128xi1>, vector<8x128xf32>
    %249 = arith.select %7, %247, %248 : vector<8x128xi1>, vector<8x128xf32>
    %250 = arith.select %9, %190, %249 : vector<8x128xi1>, vector<8x128xf32>
    %c4_i32 = arith.constant 4 : i32
    %251 = arith.index_cast %c4_i32 : i32 to index
    %c0_94 = arith.constant 0 : index
    %c0_95 = arith.constant 0 : index
    %252 = vector.load %arg2[%251, %c0_94, %c0_95] : memref<8x8x128xf32, #tpu.memory_space<vmem>>, vector<1x8x128xf32>
    %253 = vector.shape_cast %252 : vector<1x8x128xf32> to vector<8x128xf32>
    %254 = vector.shape_cast %250 : vector<8x128xf32> to vector<1x8x128xf32>
    tpu.vector_store %arg2[%251, %c0_94, %c0_95], %254 {strides = array<i32>} : memref<8x8x128xf32, #tpu.memory_space<vmem>>, vector<1x8x128xf32>,
    %cst_96 = arith.constant -2.532350e+00 : f32
    %255 = vector.broadcast %cst_96 : f32 to vector<8x128xf32>
    %256 = arith.mulf %250, %255 : vector<8x128xf32>
    %cst_97 = arith.constant 2.175850e+00 : f32
    %257 = vector.broadcast %cst_97 : f32 to vector<8x128xf32>
    %258 = arith.addf %257, %256 : vector<8x128xf32>
    %259 = arith.mulf %250, %258 : vector<8x128xf32>
    %cst_98 = arith.constant 1.368650e+00 : f32
    %260 = vector.broadcast %cst_98 : f32 to vector<8x128xf32>
    %261 = arith.addf %260, %259 : vector<8x128xf32>
    %262 = arith.mulf %250, %261 : vector<8x128xf32>
    %cst_99 = arith.constant -1.270000e-01 : f32
    %263 = vector.broadcast %cst_99 : f32 to vector<8x128xf32>
    %264 = arith.addf %263, %262 : vector<8x128xf32>
    %cst_100 = arith.constant -7.597050e+00 : f32
    %265 = vector.broadcast %cst_100 : f32 to vector<8x128xf32>
    %266 = arith.mulf %250, %265 : vector<8x128xf32>
    %cst_101 = arith.constant 4.351700e+00 : f32
    %267 = vector.broadcast %cst_101 : f32 to vector<8x128xf32>
    %268 = arith.addf %267, %266 : vector<8x128xf32>
    %269 = arith.mulf %250, %268 : vector<8x128xf32>
    %cst_102 = arith.constant 1.368650e+00 : f32
    %270 = vector.broadcast %cst_102 : f32 to vector<8x128xf32>
    %271 = arith.addf %270, %269 : vector<8x128xf32>
    %272 = math.absf %271 : vector<8x128xf32>
    %c127_i32_103 = arith.constant 127 : i32
    %273 = tpu.dynamic_rotate %250 by %c127_i32_103 dim 1 : vector<8x128xf32>, i32 -> vector<8x128xf32>
    %cst_104 = arith.constant -2.532350e+00 : f32
    %274 = vector.broadcast %cst_104 : f32 to vector<8x128xf32>
    %275 = arith.mulf %273, %274 : vector<8x128xf32>
    %cst_105 = arith.constant 2.175850e+00 : f32
    %276 = vector.broadcast %cst_105 : f32 to vector<8x128xf32>
    %277 = arith.addf %276, %275 : vector<8x128xf32>
    %278 = arith.mulf %273, %277 : vector<8x128xf32>
    %cst_106 = arith.constant 1.368650e+00 : f32
    %279 = vector.broadcast %cst_106 : f32 to vector<8x128xf32>
    %280 = arith.addf %279, %278 : vector<8x128xf32>
    %281 = arith.mulf %273, %280 : vector<8x128xf32>
    %cst_107 = arith.constant -1.270000e-01 : f32
    %282 = vector.broadcast %cst_107 : f32 to vector<8x128xf32>
    %283 = arith.addf %282, %281 : vector<8x128xf32>
    %cst_108 = arith.constant -7.597050e+00 : f32
    %284 = vector.broadcast %cst_108 : f32 to vector<8x128xf32>
    %285 = arith.mulf %273, %284 : vector<8x128xf32>
    %cst_109 = arith.constant 4.351700e+00 : f32
    %286 = vector.broadcast %cst_109 : f32 to vector<8x128xf32>
    %287 = arith.addf %286, %285 : vector<8x128xf32>
    %288 = arith.mulf %273, %287 : vector<8x128xf32>
    %cst_110 = arith.constant 1.368650e+00 : f32
    %289 = vector.broadcast %cst_110 : f32 to vector<8x128xf32>
    %290 = arith.addf %289, %288 : vector<8x128xf32>
    %291 = math.absf %290 : vector<8x128xf32>
    %292 = arith.addf %264, %283 : vector<8x128xf32>
    %cst_111 = arith.constant 5.000000e-01 : f32
    %293 = vector.broadcast %cst_111 : f32 to vector<8x128xf32>
    %294 = arith.mulf %293, %292 : vector<8x128xf32>
    %295 = arith.maximumf %272, %291 : vector<8x128xf32>
    %cst_112 = arith.constant 5.000000e-01 : f32
    %296 = vector.broadcast %cst_112 : f32 to vector<8x128xf32>
    %297 = arith.mulf %296, %295 : vector<8x128xf32>
    %298 = arith.subf %273, %250 : vector<8x128xf32>
    %299 = arith.mulf %297, %298 : vector<8x128xf32>
    %300 = arith.subf %294, %299 : vector<8x128xf32>
    %c1_i32_113 = arith.constant 1 : i32
    %301 = tpu.dynamic_rotate %300 by %c1_i32_113 dim 1 : vector<8x128xf32>, i32 -> vector<8x128xf32>
    %302 = arith.subf %300, %301 : vector<8x128xf32>
    %cst_114 = arith.constant 1.000000e-01 : f32
    %303 = vector.broadcast %cst_114 : f32 to vector<8x128xf32>
    %304 = arith.mulf %303, %302 : vector<8x128xf32>
    %305 = arith.subf %250, %304 : vector<8x128xf32>
    %c127_i32_115 = arith.constant 127 : i32
    %306 = tpu.dynamic_rotate %305 by %c127_i32_115 dim 1 : vector<8x128xf32>, i32 -> vector<8x128xf32>
    %c1_i32_116 = arith.constant 1 : i32
    %307 = tpu.dynamic_rotate %305 by %c1_i32_116 dim 1 : vector<8x128xf32>, i32 -> vector<8x128xf32>
    %308 = arith.select %5, %306, %305 : vector<8x128xi1>, vector<8x128xf32>
    %309 = arith.select %7, %307, %308 : vector<8x128xi1>, vector<8x128xf32>
    %310 = arith.select %9, %250, %309 : vector<8x128xi1>, vector<8x128xf32>
    %c5_i32 = arith.constant 5 : i32
    %311 = arith.index_cast %c5_i32 : i32 to index
    %c0_117 = arith.constant 0 : index
    %c0_118 = arith.constant 0 : index
    %312 = vector.load %arg2[%311, %c0_117, %c0_118] : memref<8x8x128xf32, #tpu.memory_space<vmem>>, vector<1x8x128xf32>
    %313 = vector.shape_cast %312 : vector<1x8x128xf32> to vector<8x128xf32>
    %314 = vector.shape_cast %310 : vector<8x128xf32> to vector<1x8x128xf32>
    tpu.vector_store %arg2[%311, %c0_117, %c0_118], %314 {strides = array<i32>} : memref<8x8x128xf32, #tpu.memory_space<vmem>>, vector<1x8x128xf32>,
    %cst_119 = arith.constant -2.532350e+00 : f32
    %315 = vector.broadcast %cst_119 : f32 to vector<8x128xf32>
    %316 = arith.mulf %310, %315 : vector<8x128xf32>
    %cst_120 = arith.constant 2.175850e+00 : f32
    %317 = vector.broadcast %cst_120 : f32 to vector<8x128xf32>
    %318 = arith.addf %317, %316 : vector<8x128xf32>
    %319 = arith.mulf %310, %318 : vector<8x128xf32>
    %cst_121 = arith.constant 1.368650e+00 : f32
    %320 = vector.broadcast %cst_121 : f32 to vector<8x128xf32>
    %321 = arith.addf %320, %319 : vector<8x128xf32>
    %322 = arith.mulf %310, %321 : vector<8x128xf32>
    %cst_122 = arith.constant -1.270000e-01 : f32
    %323 = vector.broadcast %cst_122 : f32 to vector<8x128xf32>
    %324 = arith.addf %323, %322 : vector<8x128xf32>
    %cst_123 = arith.constant -7.597050e+00 : f32
    %325 = vector.broadcast %cst_123 : f32 to vector<8x128xf32>
    %326 = arith.mulf %310, %325 : vector<8x128xf32>
    %cst_124 = arith.constant 4.351700e+00 : f32
    %327 = vector.broadcast %cst_124 : f32 to vector<8x128xf32>
    %328 = arith.addf %327, %326 : vector<8x128xf32>
    %329 = arith.mulf %310, %328 : vector<8x128xf32>
    %cst_125 = arith.constant 1.368650e+00 : f32
    %330 = vector.broadcast %cst_125 : f32 to vector<8x128xf32>
    %331 = arith.addf %330, %329 : vector<8x128xf32>
    %332 = math.absf %331 : vector<8x128xf32>
    %c127_i32_126 = arith.constant 127 : i32
    %333 = tpu.dynamic_rotate %310 by %c127_i32_126 dim 1 : vector<8x128xf32>, i32 -> vector<8x128xf32>
    %cst_127 = arith.constant -2.532350e+00 : f32
    %334 = vector.broadcast %cst_127 : f32 to vector<8x128xf32>
    %335 = arith.mulf %333, %334 : vector<8x128xf32>
    %cst_128 = arith.constant 2.175850e+00 : f32
    %336 = vector.broadcast %cst_128 : f32 to vector<8x128xf32>
    %337 = arith.addf %336, %335 : vector<8x128xf32>
    %338 = arith.mulf %333, %337 : vector<8x128xf32>
    %cst_129 = arith.constant 1.368650e+00 : f32
    %339 = vector.broadcast %cst_129 : f32 to vector<8x128xf32>
    %340 = arith.addf %339, %338 : vector<8x128xf32>
    %341 = arith.mulf %333, %340 : vector<8x128xf32>
    %cst_130 = arith.constant -1.270000e-01 : f32
    %342 = vector.broadcast %cst_130 : f32 to vector<8x128xf32>
    %343 = arith.addf %342, %341 : vector<8x128xf32>
    %cst_131 = arith.constant -7.597050e+00 : f32
    %344 = vector.broadcast %cst_131 : f32 to vector<8x128xf32>
    %345 = arith.mulf %333, %344 : vector<8x128xf32>
    %cst_132 = arith.constant 4.351700e+00 : f32
    %346 = vector.broadcast %cst_132 : f32 to vector<8x128xf32>
    %347 = arith.addf %346, %345 : vector<8x128xf32>
    %348 = arith.mulf %333, %347 : vector<8x128xf32>
    %cst_133 = arith.constant 1.368650e+00 : f32
    %349 = vector.broadcast %cst_133 : f32 to vector<8x128xf32>
    %350 = arith.addf %349, %348 : vector<8x128xf32>
    %351 = math.absf %350 : vector<8x128xf32>
    %352 = arith.addf %324, %343 : vector<8x128xf32>
    %cst_134 = arith.constant 5.000000e-01 : f32
    %353 = vector.broadcast %cst_134 : f32 to vector<8x128xf32>
    %354 = arith.mulf %353, %352 : vector<8x128xf32>
    %355 = arith.maximumf %332, %351 : vector<8x128xf32>
    %cst_135 = arith.constant 5.000000e-01 : f32
    %356 = vector.broadcast %cst_135 : f32 to vector<8x128xf32>
    %357 = arith.mulf %356, %355 : vector<8x128xf32>
    %358 = arith.subf %333, %310 : vector<8x128xf32>
    %359 = arith.mulf %357, %358 : vector<8x128xf32>
    %360 = arith.subf %354, %359 : vector<8x128xf32>
    %c1_i32_136 = arith.constant 1 : i32
    %361 = tpu.dynamic_rotate %360 by %c1_i32_136 dim 1 : vector<8x128xf32>, i32 -> vector<8x128xf32>
    %362 = arith.subf %360, %361 : vector<8x128xf32>
    %cst_137 = arith.constant 1.000000e-01 : f32
    %363 = vector.broadcast %cst_137 : f32 to vector<8x128xf32>
    %364 = arith.mulf %363, %362 : vector<8x128xf32>
    %365 = arith.subf %310, %364 : vector<8x128xf32>
    %c127_i32_138 = arith.constant 127 : i32
    %366 = tpu.dynamic_rotate %365 by %c127_i32_138 dim 1 : vector<8x128xf32>, i32 -> vector<8x128xf32>
    %c1_i32_139 = arith.constant 1 : i32
    %367 = tpu.dynamic_rotate %365 by %c1_i32_139 dim 1 : vector<8x128xf32>, i32 -> vector<8x128xf32>
    %368 = arith.select %5, %366, %365 : vector<8x128xi1>, vector<8x128xf32>
    %369 = arith.select %7, %367, %368 : vector<8x128xi1>, vector<8x128xf32>
    %370 = arith.select %9, %310, %369 : vector<8x128xi1>, vector<8x128xf32>
    %c6_i32 = arith.constant 6 : i32
    %371 = arith.index_cast %c6_i32 : i32 to index
    %c0_140 = arith.constant 0 : index
    %c0_141 = arith.constant 0 : index
    %372 = vector.load %arg2[%371, %c0_140, %c0_141] : memref<8x8x128xf32, #tpu.memory_space<vmem>>, vector<1x8x128xf32>
    %373 = vector.shape_cast %372 : vector<1x8x128xf32> to vector<8x128xf32>
    %374 = vector.shape_cast %370 : vector<8x128xf32> to vector<1x8x128xf32>
    tpu.vector_store %arg2[%371, %c0_140, %c0_141], %374 {strides = array<i32>} : memref<8x8x128xf32, #tpu.memory_space<vmem>>, vector<1x8x128xf32>,
    %cst_142 = arith.constant -2.532350e+00 : f32
    %375 = vector.broadcast %cst_142 : f32 to vector<8x128xf32>
    %376 = arith.mulf %370, %375 : vector<8x128xf32>
    %cst_143 = arith.constant 2.175850e+00 : f32
    %377 = vector.broadcast %cst_143 : f32 to vector<8x128xf32>
    %378 = arith.addf %377, %376 : vector<8x128xf32>
    %379 = arith.mulf %370, %378 : vector<8x128xf32>
    %cst_144 = arith.constant 1.368650e+00 : f32
    %380 = vector.broadcast %cst_144 : f32 to vector<8x128xf32>
    %381 = arith.addf %380, %379 : vector<8x128xf32>
    %382 = arith.mulf %370, %381 : vector<8x128xf32>
    %cst_145 = arith.constant -1.270000e-01 : f32
    %383 = vector.broadcast %cst_145 : f32 to vector<8x128xf32>
    %384 = arith.addf %383, %382 : vector<8x128xf32>
    %cst_146 = arith.constant -7.597050e+00 : f32
    %385 = vector.broadcast %cst_146 : f32 to vector<8x128xf32>
    %386 = arith.mulf %370, %385 : vector<8x128xf32>
    %cst_147 = arith.constant 4.351700e+00 : f32
    %387 = vector.broadcast %cst_147 : f32 to vector<8x128xf32>
    %388 = arith.addf %387, %386 : vector<8x128xf32>
    %389 = arith.mulf %370, %388 : vector<8x128xf32>
    %cst_148 = arith.constant 1.368650e+00 : f32
    %390 = vector.broadcast %cst_148 : f32 to vector<8x128xf32>
    %391 = arith.addf %390, %389 : vector<8x128xf32>
    %392 = math.absf %391 : vector<8x128xf32>
    %c127_i32_149 = arith.constant 127 : i32
    %393 = tpu.dynamic_rotate %370 by %c127_i32_149 dim 1 : vector<8x128xf32>, i32 -> vector<8x128xf32>
    %cst_150 = arith.constant -2.532350e+00 : f32
    %394 = vector.broadcast %cst_150 : f32 to vector<8x128xf32>
    %395 = arith.mulf %393, %394 : vector<8x128xf32>
    %cst_151 = arith.constant 2.175850e+00 : f32
    %396 = vector.broadcast %cst_151 : f32 to vector<8x128xf32>
    %397 = arith.addf %396, %395 : vector<8x128xf32>
    %398 = arith.mulf %393, %397 : vector<8x128xf32>
    %cst_152 = arith.constant 1.368650e+00 : f32
    %399 = vector.broadcast %cst_152 : f32 to vector<8x128xf32>
    %400 = arith.addf %399, %398 : vector<8x128xf32>
    %401 = arith.mulf %393, %400 : vector<8x128xf32>
    %cst_153 = arith.constant -1.270000e-01 : f32
    %402 = vector.broadcast %cst_153 : f32 to vector<8x128xf32>
    %403 = arith.addf %402, %401 : vector<8x128xf32>
    %cst_154 = arith.constant -7.597050e+00 : f32
    %404 = vector.broadcast %cst_154 : f32 to vector<8x128xf32>
    %405 = arith.mulf %393, %404 : vector<8x128xf32>
    %cst_155 = arith.constant 4.351700e+00 : f32
    %406 = vector.broadcast %cst_155 : f32 to vector<8x128xf32>
    %407 = arith.addf %406, %405 : vector<8x128xf32>
    %408 = arith.mulf %393, %407 : vector<8x128xf32>
    %cst_156 = arith.constant 1.368650e+00 : f32
    %409 = vector.broadcast %cst_156 : f32 to vector<8x128xf32>
    %410 = arith.addf %409, %408 : vector<8x128xf32>
    %411 = math.absf %410 : vector<8x128xf32>
    %412 = arith.addf %384, %403 : vector<8x128xf32>
    %cst_157 = arith.constant 5.000000e-01 : f32
    %413 = vector.broadcast %cst_157 : f32 to vector<8x128xf32>
    %414 = arith.mulf %413, %412 : vector<8x128xf32>
    %415 = arith.maximumf %392, %411 : vector<8x128xf32>
    %cst_158 = arith.constant 5.000000e-01 : f32
    %416 = vector.broadcast %cst_158 : f32 to vector<8x128xf32>
    %417 = arith.mulf %416, %415 : vector<8x128xf32>
    %418 = arith.subf %393, %370 : vector<8x128xf32>
    %419 = arith.mulf %417, %418 : vector<8x128xf32>
    %420 = arith.subf %414, %419 : vector<8x128xf32>
    %c1_i32_159 = arith.constant 1 : i32
    %421 = tpu.dynamic_rotate %420 by %c1_i32_159 dim 1 : vector<8x128xf32>, i32 -> vector<8x128xf32>
    %422 = arith.subf %420, %421 : vector<8x128xf32>
    %cst_160 = arith.constant 1.000000e-01 : f32
    %423 = vector.broadcast %cst_160 : f32 to vector<8x128xf32>
    %424 = arith.mulf %423, %422 : vector<8x128xf32>
    %425 = arith.subf %370, %424 : vector<8x128xf32>
    %c127_i32_161 = arith.constant 127 : i32
    %426 = tpu.dynamic_rotate %425 by %c127_i32_161 dim 1 : vector<8x128xf32>, i32 -> vector<8x128xf32>
    %c1_i32_162 = arith.constant 1 : i32
    %427 = tpu.dynamic_rotate %425 by %c1_i32_162 dim 1 : vector<8x128xf32>, i32 -> vector<8x128xf32>
    %428 = arith.select %5, %426, %425 : vector<8x128xi1>, vector<8x128xf32>
    %429 = arith.select %7, %427, %428 : vector<8x128xi1>, vector<8x128xf32>
    %430 = arith.select %9, %370, %429 : vector<8x128xi1>, vector<8x128xf32>
    %c7_i32 = arith.constant 7 : i32
    %431 = arith.index_cast %c7_i32 : i32 to index
    %c0_163 = arith.constant 0 : index
    %c0_164 = arith.constant 0 : index
    %432 = vector.load %arg2[%431, %c0_163, %c0_164] : memref<8x8x128xf32, #tpu.memory_space<vmem>>, vector<1x8x128xf32>
    %433 = vector.shape_cast %432 : vector<1x8x128xf32> to vector<8x128xf32>
    %434 = vector.shape_cast %430 : vector<8x128xf32> to vector<1x8x128xf32>
    tpu.vector_store %arg2[%431, %c0_163, %c0_164], %434 {strides = array<i32>} : memref<8x8x128xf32, #tpu.memory_space<vmem>>, vector<1x8x128xf32>,
    %cst_165 = arith.constant -2.532350e+00 : f32
    %435 = vector.broadcast %cst_165 : f32 to vector<8x128xf32>
    %436 = arith.mulf %430, %435 : vector<8x128xf32>
    %cst_166 = arith.constant 2.175850e+00 : f32
    %437 = vector.broadcast %cst_166 : f32 to vector<8x128xf32>
    %438 = arith.addf %437, %436 : vector<8x128xf32>
    %439 = arith.mulf %430, %438 : vector<8x128xf32>
    %cst_167 = arith.constant 1.368650e+00 : f32
    %440 = vector.broadcast %cst_167 : f32 to vector<8x128xf32>
    %441 = arith.addf %440, %439 : vector<8x128xf32>
    %442 = arith.mulf %430, %441 : vector<8x128xf32>
    %cst_168 = arith.constant -1.270000e-01 : f32
    %443 = vector.broadcast %cst_168 : f32 to vector<8x128xf32>
    %444 = arith.addf %443, %442 : vector<8x128xf32>
    %cst_169 = arith.constant -7.597050e+00 : f32
    %445 = vector.broadcast %cst_169 : f32 to vector<8x128xf32>
    %446 = arith.mulf %430, %445 : vector<8x128xf32>
    %cst_170 = arith.constant 4.351700e+00 : f32
    %447 = vector.broadcast %cst_170 : f32 to vector<8x128xf32>
    %448 = arith.addf %447, %446 : vector<8x128xf32>
    %449 = arith.mulf %430, %448 : vector<8x128xf32>
    %cst_171 = arith.constant 1.368650e+00 : f32
    %450 = vector.broadcast %cst_171 : f32 to vector<8x128xf32>
    %451 = arith.addf %450, %449 : vector<8x128xf32>
    %452 = math.absf %451 : vector<8x128xf32>
    %c127_i32_172 = arith.constant 127 : i32
    %453 = tpu.dynamic_rotate %430 by %c127_i32_172 dim 1 : vector<8x128xf32>, i32 -> vector<8x128xf32>
    %cst_173 = arith.constant -2.532350e+00 : f32
    %454 = vector.broadcast %cst_173 : f32 to vector<8x128xf32>
    %455 = arith.mulf %453, %454 : vector<8x128xf32>
    %cst_174 = arith.constant 2.175850e+00 : f32
    %456 = vector.broadcast %cst_174 : f32 to vector<8x128xf32>
    %457 = arith.addf %456, %455 : vector<8x128xf32>
    %458 = arith.mulf %453, %457 : vector<8x128xf32>
    %cst_175 = arith.constant 1.368650e+00 : f32
    %459 = vector.broadcast %cst_175 : f32 to vector<8x128xf32>
    %460 = arith.addf %459, %458 : vector<8x128xf32>
    %461 = arith.mulf %453, %460 : vector<8x128xf32>
    %cst_176 = arith.constant -1.270000e-01 : f32
    %462 = vector.broadcast %cst_176 : f32 to vector<8x128xf32>
    %463 = arith.addf %462, %461 : vector<8x128xf32>
    %cst_177 = arith.constant -7.597050e+00 : f32
    %464 = vector.broadcast %cst_177 : f32 to vector<8x128xf32>
    %465 = arith.mulf %453, %464 : vector<8x128xf32>
    %cst_178 = arith.constant 4.351700e+00 : f32
    %466 = vector.broadcast %cst_178 : f32 to vector<8x128xf32>
    %467 = arith.addf %466, %465 : vector<8x128xf32>
    %468 = arith.mulf %453, %467 : vector<8x128xf32>
    %cst_179 = arith.constant 1.368650e+00 : f32
    %469 = vector.broadcast %cst_179 : f32 to vector<8x128xf32>
    %470 = arith.addf %469, %468 : vector<8x128xf32>
    %471 = math.absf %470 : vector<8x128xf32>
    %472 = arith.addf %444, %463 : vector<8x128xf32>
    %cst_180 = arith.constant 5.000000e-01 : f32
    %473 = vector.broadcast %cst_180 : f32 to vector<8x128xf32>
    %474 = arith.mulf %473, %472 : vector<8x128xf32>
    %475 = arith.maximumf %452, %471 : vector<8x128xf32>
    %cst_181 = arith.constant 5.000000e-01 : f32
    %476 = vector.broadcast %cst_181 : f32 to vector<8x128xf32>
    %477 = arith.mulf %476, %475 : vector<8x128xf32>
    %478 = arith.subf %453, %430 : vector<8x128xf32>
    %479 = arith.mulf %477, %478 : vector<8x128xf32>
    %480 = arith.subf %474, %479 : vector<8x128xf32>
    %c1_i32_182 = arith.constant 1 : i32
    %481 = tpu.dynamic_rotate %480 by %c1_i32_182 dim 1 : vector<8x128xf32>, i32 -> vector<8x128xf32>
    %482 = arith.subf %480, %481 : vector<8x128xf32>
    %cst_183 = arith.constant 1.000000e-01 : f32
    %483 = vector.broadcast %cst_183 : f32 to vector<8x128xf32>
    %484 = arith.mulf %483, %482 : vector<8x128xf32>
    %485 = arith.subf %430, %484 : vector<8x128xf32>
    %c127_i32_184 = arith.constant 127 : i32
    %486 = tpu.dynamic_rotate %485 by %c127_i32_184 dim 1 : vector<8x128xf32>, i32 -> vector<8x128xf32>
    %c1_i32_185 = arith.constant 1 : i32
    %487 = tpu.dynamic_rotate %485 by %c1_i32_185 dim 1 : vector<8x128xf32>, i32 -> vector<8x128xf32>
    %488 = arith.select %5, %486, %485 : vector<8x128xi1>, vector<8x128xf32>
    %489 = arith.select %7, %487, %488 : vector<8x128xi1>, vector<8x128xf32>
    %490 = arith.select %9, %430, %489 : vector<8x128xi1>, vector<8x128xf32>
    %c8_i32 = arith.constant 8 : i32
    %c0_186 = arith.constant 0 : index
    %c0_187 = arith.constant 0 : index
    %491 = vector.load %arg3[%c0_186, %c0_187] : memref<8x128xf32, #tpu.memory_space<vmem>>, vector<8x128xf32>
    tpu.vector_store %arg3[%c0_186, %c0_187], %490 {strides = array<i32>} : memref<8x128xf32, #tpu.memory_space<vmem>>, vector<8x128xf32>,
    return
  }
  func.func @transform_0(%arg0: i32) -> (i32, i32) {
    %c0_i32 = arith.constant 0 : i32
    %c0_i32_0 = arith.constant 0 : i32
    %c0_i32_1 = arith.constant 0 : i32
    return %c0_i32, %c0_i32_0 : i32, i32
  }
  func.func @transform_1(%arg0: i32) -> (i32, i32, i32) {
    %c0_i32 = arith.constant 0 : i32
    %c0_i32_0 = arith.constant 0 : i32
    %c0_i32_1 = arith.constant 0 : i32
    return %arg0, %c0_i32, %c0_i32_0 : i32, i32, i32
  }
}

</mosaic_0001>

<llo_original>
// kernel: tpu_custom_call.1
$region0: #{tpu_custom_call.1}
  #allocation0 [shape = 'u32[]', space=smem, size = 0x4, offset = 0x4, fixed_abs, tag = 'smem constant byte address 0x4 - core index']
  #allocation1 [shape = 'u32[144,128]{1,0:T(1,128)}', space=vmem, size = 0x12000, scoped, tag = 'internal scratch']
  #allocation2 [shape = 'f32[8,128]{1,0:T(8,128)}', space=vmem, size = 0x1000, scoped, tag = 'scratch operand']
  %s0 = inlined_call_operand.hbm [shape: f32[8,128], index: 0, kind: input, shape index: {}]
  %s1 = inlined_call_operand.hbm [shape: f32[8,8,128], index: 1, kind: output, shape index: {}]
  %s2 = sld [smem:[#allocation0]]
  $region22: #{tpu_custom_call.1} parent=0
    _
  %s4 = ssub.s32 1, %s2
  %s5 = scalar_select 0, %s4, %s2
  $region1: #{tpu_custom_call.1} parent=0
    #allocation3 [shape = 'u8[4096]{0}', space=vmem, size = 0x1000, scoped, tag = 'input window, operand 0, single buffered']
    #allocation4 [shape = 's32[1]{0}', space=sflag, size = 0x4, scoped, tag = 'scoped memory for tpu_custom_call.1']
    #allocation5 [shape = 's32[1]{0}', space=sflag, size = 0x4, scoped, tag = 'scoped memory for tpu_custom_call.1']
    #allocation6 [shape = 'u8[32768]{0}', space=vmem, size = 0x8000, scoped, tag = 'output window, operand 0, single buffered']
    %6 = vsyncpa [#allocation4], 0
    %7 = vsyncpa [#allocation5], 0
    // Predicated region
    $region2: #{tpu_custom_call.1} parent=1 // pred_check
      _
    $region3: #{tpu_custom_call.1} parent=1 // pred_check_branch
      %9 = sbr.rel (0) target = $region5
    $region4: #{tpu_custom_call.1} parent=1 // pred_region
      %s11 = ssub.s32 128, 128
      %12 = vsyncadd [#allocation4], %s11
      %s14 = sshll.u32 [#allocation3], 4
      %s15 = int_to_ptr.vmem [resolvable:$true] %s14
      %17 = dma.hbm_to_vmem [thread:$0]  %s0, 128, %s15, [#allocation4]
    $region5: #{tpu_custom_call.1} parent=1 // pred_fallthru
      _
    // Predicated region
    $region6: #{tpu_custom_call.1} parent=1 // pred_check
      _
    $region7: #{tpu_custom_call.1} parent=1 // pred_check_branch
      %19 = sbr.rel (0) target = $region9
    $region8: #{tpu_custom_call.1} parent=1 // pred_region
      %20 = dma.done [#allocation4], 128
    $region9: #{tpu_custom_call.1} parent=1 // pred_fallthru
      _
    %p21 = scmp.eq.s32.totalorder 0, 0
    // Predicated region
    $region10: #{tpu_custom_call.1} parent=1 // pred_check
      %p22 = pneg %p21
    $region11: #{tpu_custom_call.1} parent=1 // pred_check_branch
      %24 = sbr.rel (%p22) target = $region13
    $region12: #{tpu_custom_call.1} parent=1 // pred_region
      %v25 = vld [vmem:[#allocation3] sm:$0xff]
      %26 = vst [vmem:[#allocation2] sm:$0xff] %v25
    $region13: #{tpu_custom_call.1} parent=1 // pred_fallthru
      _
    %v27 = vlaneseq
    %v28 = vand.u32 %v27, 127
    %vm29 = vcmp.eq.s32.totalorder %v28, 0
    %vm30 = vcmp.eq.s32.totalorder %v28, 15
    %vm31 = vcmp.ge.s32.totalorder %v28, 16
    %v32 = vld [vmem:[#allocation2] sm:$0xff]
    %33 = vst [vmem:[#allocation6] sm:$0xff] %v32
    %v34 = vmul.f32 %v32, -2.53235
    %v35 = vadd.f32 %v34, 2.17585
    %v36 = vmul.f32 %v32, %v35
    %v37 = vadd.f32 %v36, 1.36865
    %v38 = vmul.f32 %v32, %v37
    %v39 = vadd.f32 %v38, -0.127
    %v40 = vmul.f32 %v32, -7.59705
    %v41 = vadd.f32 %v40, 4.3517
    %v42 = vmul.f32 %v32, %v41
    %v43 = vadd.f32 %v42, 1.36865
    %v44 = vand.u32 2147483647, %v43
    %45 = vrot.lane.b32.xlu0 %v32, 127
    %v46 = vpop.permute.xlu0 %45
    %v47 = vmul.f32 %v46, -2.53235
    %v48 = vadd.f32 %v47, 2.17585
    %v49 = vmul.f32 %v46, %v48
    %v50 = vadd.f32 %v49, 1.36865
    %v51 = vmul.f32 %v46, %v50
    %v52 = vadd.f32 %v51, -0.127
    %v53 = vmul.f32 %v46, -7.59705
    %v54 = vadd.f32 %v53, 4.3517
    %v55 = vmul.f32 %v46, %v54
    %v56 = vadd.f32 %v55, 1.36865
    %v57 = vand.u32 2147483647, %v56
    %v58 = vadd.f32 %v39, %v52
    %v59 = vmul.f32 %v58, 0.5
    %v60 = vmax.f32 %v44, %v57
    %v61 = vmul.f32 %v60, 0.5
    %v62 = vsub.f32 %v46, %v32
    %v63 = vmul.f32 %v61, %v62
    %v64 = vsub.f32 %v59, %v63
    %65 = vrot.lane.b32.xlu0 %v64, 1
    %v66 = vpop.permute.xlu0 %65
    %v67 = vsub.f32 %v64, %v66
    %v68 = vmul.f32 %v67, 0.1
    %v69 = vsub.f32 %v32, %v68
    %70 = vrot.lane.b32.xlu0 %v69, 127
    %v71 = vpop.permute.xlu0 %70
    %72 = vrot.lane.b32.xlu0 %v69, 1
    %v73 = vpop.permute.xlu0 %72
    %v74 = vsel %vm29, %v71, %v69
    %v75 = vsel %vm30, %v73, %v74
    %v76 = vsel %vm31, %v32, %v75
    %s77 = scalar_lea.vmem [#allocation6], 8
    %78 = vst [vmem:[%s77] sm:$0xff] %v76
    %v79 = vmul.f32 %v76, -2.53235
    %v80 = vadd.f32 %v79, 2.17585
    %v81 = vmul.f32 %v76, %v80
    %v82 = vadd.f32 %v81, 1.36865
    %v83 = vmul.f32 %v76, %v82
    %v84 = vadd.f32 %v83, -0.127
    %v85 = vmul.f32 %v76, -7.59705
    %v86 = vadd.f32 %v85, 4.3517
    %v87 = vmul.f32 %v76, %v86
    %v88 = vadd.f32 %v87, 1.36865
    %v89 = vand.u32 2147483647, %v88
    %90 = vrot.lane.b32.xlu0 %v76, 127
    %v91 = vpop.permute.xlu0 %90
    %v92 = vmul.f32 %v91, -2.53235
    %v93 = vadd.f32 %v92, 2.17585
    %v94 = vmul.f32 %v91, %v93
    %v95 = vadd.f32 %v94, 1.36865
    %v96 = vmul.f32 %v91, %v95
    %v97 = vadd.f32 %v96, -0.127
    %v98 = vmul.f32 %v91, -7.59705
    %v99 = vadd.f32 %v98, 4.3517
    %v100 = vmul.f32 %v91, %v99
    %v101 = vadd.f32 %v100, 1.36865
    %v102 = vand.u32 2147483647, %v101
    %v103 = vadd.f32 %v84, %v97
    %v104 = vmul.f32 %v103, 0.5
    %v105 = vmax.f32 %v89, %v102
    %v106 = vmul.f32 %v105, 0.5
    %v107 = vsub.f32 %v91, %v76
    %v108 = vmul.f32 %v106, %v107
    %v109 = vsub.f32 %v104, %v108
    %110 = vrot.lane.b32.xlu0 %v109, 1
    %v111 = vpop.permute.xlu0 %110
    %v112 = vsub.f32 %v109, %v111
    %v113 = vmul.f32 %v112, 0.1
    %v114 = vsub.f32 %v76, %v113
    %115 = vrot.lane.b32.xlu0 %v114, 127
    %v116 = vpop.permute.xlu0 %115
    %117 = vrot.lane.b32.xlu0 %v114, 1
    %v118 = vpop.permute.xlu0 %117
    %v119 = vsel %vm29, %v116, %v114
    %v120 = vsel %vm30, %v118, %v119
    %v121 = vsel %vm31, %v32, %v120
    %s122 = scalar_lea.vmem [#allocation6], 16
    %123 = vst [vmem:[%s122] sm:$0xff] %v121
    %v124 = vmul.f32 %v121, -2.53235
    %v125 = vadd.f32 %v124, 2.17585
    %v126 = vmul.f32 %v121, %v125
    %v127 = vadd.f32 %v126, 1.36865
    %v128 = vmul.f32 %v121, %v127
    %v129 = vadd.f32 %v128, -0.127
    %v130 = vmul.f32 %v121, -7.59705
    %v131 = vadd.f32 %v130, 4.3517
    %v132 = vmul.f32 %v121, %v131
    %v133 = vadd.f32 %v132, 1.36865
    %v134 = vand.u32 2147483647, %v133
    %135 = vrot.lane.b32.xlu0 %v121, 127
    %v136 = vpop.permute.xlu0 %135
    %v137 = vmul.f32 %v136, -2.53235
    %v138 = vadd.f32 %v137, 2.17585
    %v139 = vmul.f32 %v136, %v138
    %v140 = vadd.f32 %v139, 1.36865
    %v141 = vmul.f32 %v136, %v140
    %v142 = vadd.f32 %v141, -0.127
    %v143 = vmul.f32 %v136, -7.59705
    %v144 = vadd.f32 %v143, 4.3517
    %v145 = vmul.f32 %v136, %v144
    %v146 = vadd.f32 %v145, 1.36865
    %v147 = vand.u32 2147483647, %v146
    %v148 = vadd.f32 %v129, %v142
    %v149 = vmul.f32 %v148, 0.5
    %v150 = vmax.f32 %v134, %v147
    %v151 = vmul.f32 %v150, 0.5
    %v152 = vsub.f32 %v136, %v121
    %v153 = vmul.f32 %v151, %v152
    %v154 = vsub.f32 %v149, %v153
    %155 = vrot.lane.b32.xlu0 %v154, 1
    %v156 = vpop.permute.xlu0 %155
    %v157 = vsub.f32 %v154, %v156
    %v158 = vmul.f32 %v157, 0.1
    %v159 = vsub.f32 %v121, %v158
    %160 = vrot.lane.b32.xlu0 %v159, 127
    %v161 = vpop.permute.xlu0 %160
    %162 = vrot.lane.b32.xlu0 %v159, 1
    %v163 = vpop.permute.xlu0 %162
    %v164 = vsel %vm29, %v161, %v159
    %v165 = vsel %vm30, %v163, %v164
    %v166 = vsel %vm31, %v32, %v165
    %s167 = scalar_lea.vmem [#allocation6], 24
    %168 = vst [vmem:[%s167] sm:$0xff] %v166
    %v169 = vmul.f32 %v166, -2.53235
    %v170 = vadd.f32 %v169, 2.17585
    %v171 = vmul.f32 %v166, %v170
    %v172 = vadd.f32 %v171, 1.36865
    %v173 = vmul.f32 %v166, %v172
    %v174 = vadd.f32 %v173, -0.127
    %v175 = vmul.f32 %v166, -7.59705
    %v176 = vadd.f32 %v175, 4.3517
    %v177 = vmul.f32 %v166, %v176
    %v178 = vadd.f32 %v177, 1.36865
    %v179 = vand.u32 2147483647, %v178
    %180 = vrot.lane.b32.xlu0 %v166, 127
    %v181 = vpop.permute.xlu0 %180
    %v182 = vmul.f32 %v181, -2.53235
    %v183 = vadd.f32 %v182, 2.17585
    %v184 = vmul.f32 %v181, %v183
    %v185 = vadd.f32 %v184, 1.36865
    %v186 = vmul.f32 %v181, %v185
    %v187 = vadd.f32 %v186, -0.127
    %v188 = vmul.f32 %v181, -7.59705
    %v189 = vadd.f32 %v188, 4.3517
    %v190 = vmul.f32 %v181, %v189
    %v191 = vadd.f32 %v190, 1.36865
    %v192 = vand.u32 2147483647, %v191
    %v193 = vadd.f32 %v174, %v187
    %v194 = vmul.f32 %v193, 0.5
    %v195 = vmax.f32 %v179, %v192
    %v196 = vmul.f32 %v195, 0.5
    %v197 = vsub.f32 %v181, %v166
    %v198 = vmul.f32 %v196, %v197
    %v199 = vsub.f32 %v194, %v198
    %200 = vrot.lane.b32.xlu0 %v199, 1
    %v201 = vpop.permute.xlu0 %200
    %v202 = vsub.f32 %v199, %v201
    %v203 = vmul.f32 %v202, 0.1
    %v204 = vsub.f32 %v166, %v203
    %205 = vrot.lane.b32.xlu0 %v204, 127
    %v206 = vpop.permute.xlu0 %205
    %207 = vrot.lane.b32.xlu0 %v204, 1
    %v208 = vpop.permute.xlu0 %207
    %v209 = vsel %vm29, %v206, %v204
    %v210 = vsel %vm30, %v208, %v209
    %v211 = vsel %vm31, %v32, %v210
    %s212 = scalar_lea.vmem [#allocation6], 32
    %213 = vst [vmem:[%s212] sm:$0xff] %v211
    %v214 = vmul.f32 %v211, -2.53235
    %v215 = vadd.f32 %v214, 2.17585
    %v216 = vmul.f32 %v211, %v215
    %v217 = vadd.f32 %v216, 1.36865
    %v218 = vmul.f32 %v211, %v217
    %v219 = vadd.f32 %v218, -0.127
    %v220 = vmul.f32 %v211, -7.59705
    %v221 = vadd.f32 %v220, 4.3517
    %v222 = vmul.f32 %v211, %v221
    %v223 = vadd.f32 %v222, 1.36865
    %v224 = vand.u32 2147483647, %v223
    %225 = vrot.lane.b32.xlu0 %v211, 127
    %v226 = vpop.permute.xlu0 %225
    %v227 = vmul.f32 %v226, -2.53235
    %v228 = vadd.f32 %v227, 2.17585
    %v229 = vmul.f32 %v226, %v228
    %v230 = vadd.f32 %v229, 1.36865
    %v231 = vmul.f32 %v226, %v230
    %v232 = vadd.f32 %v231, -0.127
    %v233 = vmul.f32 %v226, -7.59705
    %v234 = vadd.f32 %v233, 4.3517
    %v235 = vmul.f32 %v226, %v234
    %v236 = vadd.f32 %v235, 1.36865
    %v237 = vand.u32 2147483647, %v236
    %v238 = vadd.f32 %v219, %v232
    %v239 = vmul.f32 %v238, 0.5
    %v240 = vmax.f32 %v224, %v237
    %v241 = vmul.f32 %v240, 0.5
    %v242 = vsub.f32 %v226, %v211
    %v243 = vmul.f32 %v241, %v242
    %v244 = vsub.f32 %v239, %v243
    %245 = vrot.lane.b32.xlu0 %v244, 1
    %v246 = vpop.permute.xlu0 %245
    %v247 = vsub.f32 %v244, %v246
    %v248 = vmul.f32 %v247, 0.1
    %v249 = vsub.f32 %v211, %v248
    %250 = vrot.lane.b32.xlu0 %v249, 127
    %v251 = vpop.permute.xlu0 %250
    %252 = vrot.lane.b32.xlu0 %v249, 1
    %v253 = vpop.permute.xlu0 %252
    %v254 = vsel %vm29, %v251, %v249
    %v255 = vsel %vm30, %v253, %v254
    %v256 = vsel %vm31, %v32, %v255
    %s257 = scalar_lea.vmem [#allocation6], 40
    %258 = vst [vmem:[%s257] sm:$0xff] %v256
    %v259 = vmul.f32 %v256, -2.53235
    %v260 = vadd.f32 %v259, 2.17585
    %v261 = vmul.f32 %v256, %v260
    %v262 = vadd.f32 %v261, 1.36865
    %v263 = vmul.f32 %v256, %v262
    %v264 = vadd.f32 %v263, -0.127
    %v265 = vmul.f32 %v256, -7.59705
    %v266 = vadd.f32 %v265, 4.3517
    %v267 = vmul.f32 %v256, %v266
    %v268 = vadd.f32 %v267, 1.36865
    %v269 = vand.u32 2147483647, %v268
    %270 = vrot.lane.b32.xlu0 %v256, 127
    %v271 = vpop.permute.xlu0 %270
    %v272 = vmul.f32 %v271, -2.53235
    %v273 = vadd.f32 %v272, 2.17585
    %v274 = vmul.f32 %v271, %v273
    %v275 = vadd.f32 %v274, 1.36865
    %v276 = vmul.f32 %v271, %v275
    %v277 = vadd.f32 %v276, -0.127
    %v278 = vmul.f32 %v271, -7.59705
    %v279 = vadd.f32 %v278, 4.3517
    %v280 = vmul.f32 %v271, %v279
    %v281 = vadd.f32 %v280, 1.36865
    %v282 = vand.u32 2147483647, %v281
    %v283 = vadd.f32 %v264, %v277
    %v284 = vmul.f32 %v283, 0.5
    %v285 = vmax.f32 %v269, %v282
    %v286 = vmul.f32 %v285, 0.5
    %v287 = vsub.f32 %v271, %v256
    %v288 = vmul.f32 %v286, %v287
    %v289 = vsub.f32 %v284, %v288
    %290 = vrot.lane.b32.xlu0 %v289, 1
    %v291 = vpop.permute.xlu0 %290
    %v292 = vsub.f32 %v289, %v291
    %v293 = vmul.f32 %v292, 0.1
    %v294 = vsub.f32 %v256, %v293
    %295 = vrot.lane.b32.xlu0 %v294, 127
    %v296 = vpop.permute.xlu0 %295
    %297 = vrot.lane.b32.xlu0 %v294, 1
    %v298 = vpop.permute.xlu0 %297
    %v299 = vsel %vm29, %v296, %v294
    %v300 = vsel %vm30, %v298, %v299
    %v301 = vsel %vm31, %v32, %v300
    %s302 = scalar_lea.vmem [#allocation6], 48
    %303 = vst [vmem:[%s302] sm:$0xff] %v301
    %v304 = vmul.f32 %v301, -2.53235
    %v305 = vadd.f32 %v304, 2.17585
    %v306 = vmul.f32 %v301, %v305
    %v307 = vadd.f32 %v306, 1.36865
    %v308 = vmul.f32 %v301, %v307
    %v309 = vadd.f32 %v308, -0.127
    %v310 = vmul.f32 %v301, -7.59705
    %v311 = vadd.f32 %v310, 4.3517
    %v312 = vmul.f32 %v301, %v311
    %v313 = vadd.f32 %v312, 1.36865
    %v314 = vand.u32 2147483647, %v313
    %315 = vrot.lane.b32.xlu0 %v301, 127
    %v316 = vpop.permute.xlu0 %315
    %v317 = vmul.f32 %v316, -2.53235
    %v318 = vadd.f32 %v317, 2.17585
    %v319 = vmul.f32 %v316, %v318
    %v320 = vadd.f32 %v319, 1.36865
    %v321 = vmul.f32 %v316, %v320
    %v322 = vadd.f32 %v321, -0.127
    %v323 = vmul.f32 %v316, -7.59705
    %v324 = vadd.f32 %v323, 4.3517
    %v325 = vmul.f32 %v316, %v324
    %v326 = vadd.f32 %v325, 1.36865
    %v327 = vand.u32 2147483647, %v326
    %v328 = vadd.f32 %v309, %v322
    %v329 = vmul.f32 %v328, 0.5
    %v330 = vmax.f32 %v314, %v327
    %v331 = vmul.f32 %v330, 0.5
    %v332 = vsub.f32 %v316, %v301
    %v333 = vmul.f32 %v331, %v332
    %v334 = vsub.f32 %v329, %v333
    %335 = vrot.lane.b32.xlu0 %v334, 1
    %v336 = vpop.permute.xlu0 %335
    %v337 = vsub.f32 %v334, %v336
    %v338 = vmul.f32 %v337, 0.1
    %v339 = vsub.f32 %v301, %v338
    %340 = vrot.lane.b32.xlu0 %v339, 127
    %v341 = vpop.permute.xlu0 %340
    %342 = vrot.lane.b32.xlu0 %v339, 1
    %v343 = vpop.permute.xlu0 %342
    %v344 = vsel %vm29, %v341, %v339
    %v345 = vsel %vm30, %v343, %v344
    %v346 = vsel %vm31, %v32, %v345
    %s347 = scalar_lea.vmem [#allocation6], 56
    %348 = vst [vmem:[%s347] sm:$0xff] %v346
    %v349 = vmul.f32 %v346, -2.53235
    %v350 = vadd.f32 %v349, 2.17585
    %v351 = vmul.f32 %v346, %v350
    %v352 = vadd.f32 %v351, 1.36865
    %v353 = vmul.f32 %v346, %v352
    %v354 = vadd.f32 %v353, -0.127
    %v355 = vmul.f32 %v346, -7.59705
    %v356 = vadd.f32 %v355, 4.3517
    %v357 = vmul.f32 %v346, %v356
    %v358 = vadd.f32 %v357, 1.36865
    %v359 = vand.u32 2147483647, %v358
    %360 = vrot.lane.b32.xlu0 %v346, 127
    %v361 = vpop.permute.xlu0 %360
    %v362 = vmul.f32 %v361, -2.53235
    %v363 = vadd.f32 %v362, 2.17585
    %v364 = vmul.f32 %v361, %v363
    %v365 = vadd.f32 %v364, 1.36865
    %v366 = vmul.f32 %v361, %v365
    %v367 = vadd.f32 %v366, -0.127
    %v368 = vmul.f32 %v361, -7.59705
    %v369 = vadd.f32 %v368, 4.3517
    %v370 = vmul.f32 %v361, %v369
    %v371 = vadd.f32 %v370, 1.36865
    %v372 = vand.u32 2147483647, %v371
    %v373 = vadd.f32 %v354, %v367
    %v374 = vmul.f32 %v373, 0.5
    %v375 = vmax.f32 %v359, %v372
    %v376 = vmul.f32 %v375, 0.5
    %v377 = vsub.f32 %v361, %v346
    %v378 = vmul.f32 %v376, %v377
    %v379 = vsub.f32 %v374, %v378
    %380 = vrot.lane.b32.xlu0 %v379, 1
    %v381 = vpop.permute.xlu0 %380
    %v382 = vsub.f32 %v379, %v381
    %v383 = vmul.f32 %v382, 0.1
    %v384 = vsub.f32 %v346, %v383
    %385 = vrot.lane.b32.xlu0 %v384, 127
    %v386 = vpop.permute.xlu0 %385
    %387 = vrot.lane.b32.xlu0 %v384, 1
    %v388 = vpop.permute.xlu0 %387
    %v389 = vsel %vm29, %v386, %v384
    %v390 = vsel %vm30, %v388, %v389
    %v391 = vsel %vm31, %v32, %v390
    %392 = vst [vmem:[#allocation2] sm:$0xff] %v391
    // Predicated region
    $region14: #{tpu_custom_call.1} parent=1 // pred_check
      _
    $region15: #{tpu_custom_call.1} parent=1 // pred_check_branch
      %394 = sbr.rel (0) target = $region17
    $region16: #{tpu_custom_call.1} parent=1 // pred_region
      %s396 = ssub.s32 1024, 1024
      %397 = vsyncadd [#allocation5], %s396
      %s398 = sshll.u32 [#allocation6], 4
      %s399 = int_to_ptr.vmem [resolvable:$true] %s398
      %404 = dma.vmem_to_hbm [thread:$0]  %s399, 1024, %s1, [#allocation5], 128, 128, 8
    $region17: #{tpu_custom_call.1} parent=1 // pred_fallthru
      _
    // Predicated region
    $region18: #{tpu_custom_call.1} parent=1 // pred_check
      _
    $region19: #{tpu_custom_call.1} parent=1 // pred_check_branch
      %406 = sbr.rel (0) target = $region21
    $region20: #{tpu_custom_call.1} parent=1 // pred_region
      %407 = dma.done [#allocation5], 1024
    $region21: #{tpu_custom_call.1} parent=1 // pred_fallthru
      _
    %408 = vsyncpa [#allocation4], 1
    %409 = vsyncpa [#allocation5], 1

</llo_original>
